<compile_context>
chip_gen: v6e
topology: v6e:2x2x1
jax: 0.10.0
libtpu: 0.0.40
codegen_flags: <defaults>
</compile_context>

<pallas_src>
import functools

import jax
import jax.numpy as jnp
from jax.experimental import pallas as pl
from jax.experimental.pallas import tpu as pltpu


def actor_critic_kernel(
    n_actions,
    x_ref,               # (tb, F) f32
    w1_ref, b1_ref,      # shared layer 1 (f32; computed on the VPU, K=F is tiny)
    w2_ref, b2_ref,      # shared layer 2 (w2 bf16, b2 f32)
    wh1_ref, bh1_ref,    # fused head layer 1: [wp1 | wv1] -> (128, 128) (bf16 / f32)
    wh2_ref, bh2_ref,    # fused head layer 2: block-diag -> (128, out_w) (bf16 / f32)
    out_ref,             # (tb, out_w) f32: probs in lanes [0, n_actions), value in lane n_actions
):
    x = x_ref[...]                       # (tb, F) f32
    w1 = w1_ref[...]                     # (F, 128) f32
    feat = x.shape[1]

    # --- shared layer 1 on the VPU: F broadcast multiply-adds, no MXU pass ---
    h = x[:, 0:1] * w1[0:1, :] + b1_ref[...]           # (tb, 128) f32
    for k in range(1, feat):
        h = h + x[:, k:k + 1] * w1[k:k + 1, :]
    h = jnp.maximum(h, 0.0)

    # --- shared layer 2 (bf16 MXU matmul, f32 accumulate) ---
    h = jnp.dot(h.astype(jnp.bfloat16), w2_ref[...],
                preferred_element_type=jnp.float32) + b2_ref[...]
    h = jnp.maximum(h, 0.0)

    # --- fused policy+value head layer 1 (one wide bf16 matmul) ---
    h1 = jnp.dot(h.astype(jnp.bfloat16), wh1_ref[...],
                 preferred_element_type=jnp.float32) + bh1_ref[...]
    h1 = jnp.maximum(h1, 0.0)

    # --- fused head layer 2: block-diagonal weight, compact out_w lanes ---
    z = jnp.dot(h1.astype(jnp.bfloat16), wh2_ref[...],
                preferred_element_type=jnp.float32) + bh2_ref[...]
    # z lanes: [0, n_actions) = policy logits, [n_actions] = value, rest = 0

    # masked softmax over the policy lanes only (f32 math)
    col = jax.lax.broadcasted_iota(jnp.int32, z.shape, 1)
    is_pol = col < n_actions
    logits = jnp.where(is_pol, z, -jnp.inf)
    m = jnp.max(logits, axis=-1, keepdims=True)
    e = jnp.exp(logits - m)                          # padded lanes -> exp(-inf) = 0
    denom = jnp.sum(e, axis=-1, keepdims=True)
    probs = e * pl.reciprocal(denom, approx=False)   # exact reciprocal (VALU path)

    # compact output: probs in policy lanes, raw z (value / zeros) elsewhere
    out_ref[...] = jnp.where(is_pol, probs, z)


def init_params(key, input_dim, n_actions):
    """U(-1/sqrt(fan_in), +1/sqrt(fan_in)) init, weights stored as (in, out), f32."""
    dims = [
        ("w1", (input_dim, 128)), ("b1", (1, 128)),
        ("w2", (128, 128)),       ("b2", (1, 128)),
        ("wp1", (128, 64)),       ("bp1", (1, 64)),
        ("wp2", (64, n_actions)), ("bp2", (1, n_actions)),
        ("wv1", (128, 64)),       ("bv1", (1, 64)),
        ("wv2", (64, 1)),         ("bv2", (1, 1)),
    ]
    params = {}
    keys = jax.random.split(key, len(dims))
    for (name, shape), k in zip(dims, keys):
        fan_in = shape[0] if name.startswith("w") else shape[1]
        bound = 1.0 / jnp.sqrt(jnp.float32(fan_in))
        params[name] = jax.random.uniform(
            k, shape, dtype=jnp.float32, minval=-bound, maxval=bound
        )
    return params


def _pack_fused_params(params, n_actions, out_w):
    """Build fused head / bf16 weights once, outside the kernel."""
    w2 = params["w2"].astype(jnp.bfloat16)

    # Head layer 1: concat policy/value hidden layers -> one (128, 128) matmul.
    wh1 = jnp.concatenate([params["wp1"], params["wv1"]], axis=1).astype(jnp.bfloat16)
    bh1 = jnp.concatenate([params["bp1"], params["bv1"]], axis=1)   # (1, 128) f32

    # Head layer 2: block-diagonal, padded to out_w lanes (exact zeros
    # off-diagonal / in padding preserve results).
    wh2 = jnp.zeros((128, out_w), jnp.float32)
    wh2 = wh2.at[:64, :n_actions].set(params["wp2"])
    wh2 = wh2.at[64:, n_actions].set(params["wv2"][:, 0])
    wh2 = wh2.astype(jnp.bfloat16)
    bh2 = jnp.zeros((1, out_w), jnp.float32)
    bh2 = bh2.at[:, :n_actions].set(params["bp2"][0])
    bh2 = bh2.at[:, n_actions].set(params["bv2"][0, 0])
    return w2, wh1, bh1, wh2, bh2


def actor_critic_forward(x, params, *, block_b=1024):
    B, F = x.shape
    n_actions = params["wp2"].shape[1]
    out_w = ((n_actions + 1 + 7) // 8) * 8   # compact output width (>= n_actions + 1)

    w2, wh1, bh1, wh2, bh2 = _pack_fused_params(params, n_actions, out_w)

    # Batch tiling: round B up to a sublane multiple, tile with tb (<= block_b).
    b_ceil8 = ((B + 7) // 8) * 8
    tb = min(block_b, b_ceil8)
    # v7x megacore: if the whole (large) batch fits in a single tile, split it
    # so the "parallel" batch axis has >= 2 grid steps (no-op on v5e/v6e).
    if b_ceil8 >= 256 and pl.cdiv(b_ceil8, tb) < 2:
        tb = ((pl.cdiv(b_ceil8, 2) + 7) // 8) * 8
    grid_b = pl.cdiv(b_ceil8, tb)
    b_pad = grid_b * tb
    if b_pad != B:
        x = jnp.pad(x, ((0, b_pad - B), (0, 0)))

    full = lambda i: (0, 0)  # weights/biases stay VMEM-resident across batch tiles
    in_specs = [
        pl.BlockSpec((tb, F), lambda i: (i, 0)),            # x: tiled over batch
        pl.BlockSpec((F, 128), full),     pl.BlockSpec((1, 128), full),
        pl.BlockSpec((128, 128), full),   pl.BlockSpec((1, 128), full),
        pl.BlockSpec((128, 128), full),   pl.BlockSpec((1, 128), full),
        pl.BlockSpec((128, out_w), full), pl.BlockSpec((1, out_w), full),
    ]
    out_spec = pl.BlockSpec((tb, out_w), lambda i: (i, 0))

    out = pl.pallas_call(
        functools.partial(actor_critic_kernel, n_actions),
        out_shape=jax.ShapeDtypeStruct((b_pad, out_w), jnp.float32),
        grid=(grid_b,),
        in_specs=in_specs,
        out_specs=out_spec,
        compiler_params=pltpu.CompilerParams(
            dimension_semantics=("parallel",),
        ),
    )(
        x,
        params["w1"], params["b1"],
        w2, params["b2"],
        wh1, bh1, wh2, bh2,
    )

    policy = out[:B, :n_actions]
    value = out[:B, n_actions:n_actions + 1]
    return policy, value


def reference_forward(x, p):
    relu = lambda z: jnp.maximum(z, 0.0)
    h = relu(x @ p["w1"] + p["b1"])
    h = relu(h @ p["w2"] + p["b2"])
    pol = relu(h @ p["wp1"] + p["bp1"]) @ p["wp2"] + p["bp2"]
    pol = jax.nn.softmax(pol, axis=-1)
    val = relu(h @ p["wv1"] + p["bv1"]) @ p["wv2"] + p["bv2"]
    return pol, val


if __name__ == "__main__":
    key = jax.random.PRNGKey(0)
    k_x, k_p = jax.random.split(key)

    batch = 8
    input_dim = 4      # input_shape = (4,)
    n_actions = 6

    x = jax.random.normal(k_x, (batch, input_dim), dtype=jnp.float32)
    params = init_params(k_p, input_dim, n_actions)

    policy, value = actor_critic_forward(x, params)
    jax.block_until_ready((policy, value))

    # sanity check against a pure-JAX f32 reference (bf16 matmuls -> relaxed tol)
    pol_ref, val_ref = reference_forward(x, params)
    assert policy.shape == (batch, n_actions)
    assert value.shape == (batch, 1)
    assert jnp.allclose(policy, pol_ref, atol=2e-2, rtol=2e-2)
    assert jnp.allclose(value, val_ref, atol=2e-2, rtol=2e-2)
    assert jnp.allclose(jnp.sum(policy, axis=-1), 1.0, atol=1e-4)

    print("KERNEL_OK")
</pallas_src>

<mosaic_0001>
module attributes {stable_mosaic.version = 11 : i64} {
  func.func @actor_critic_kernel(%arg0: i32, %arg1: memref<8x4xf32, #tpu.memory_space<vmem>>, %arg2: memref<4x128xf32, #tpu.memory_space<vmem>>, %arg3: memref<1x128xf32, #tpu.memory_space<vmem>>, %arg4: memref<128x128xbf16, #tpu.memory_space<vmem>>, %arg5: memref<1x128xf32, #tpu.memory_space<vmem>>, %arg6: memref<128x128xbf16, #tpu.memory_space<vmem>>, %arg7: memref<1x128xf32, #tpu.memory_space<vmem>>, %arg8: memref<128x8xbf16, #tpu.memory_space<vmem>>, %arg9: memref<1x8xf32, #tpu.memory_space<vmem>>, %arg10: memref<8x8xf32, #tpu.memory_space<vmem>>) attributes {dimension_semantics = [#tpu.dimension_semantics<parallel>], iteration_bounds = array<i64: 1>, scalar_prefetch = 0 : i64, scratch_operands = 0 : i64, tpu.core_type = #tpu.core_type<tc>, window_params = [{transform_indices = @transform_0, window_bounds = array<i64: 8, 4>}, {pipeline_mode = #tpu.pipeline_mode<synchronous>, transform_indices = @transform_1, window_bounds = array<i64: 4, 128>}, {pipeline_mode = #tpu.pipeline_mode<synchronous>, transform_indices = @transform_2, window_bounds = array<i64: 1, 128>}, {pipeline_mode = #tpu.pipeline_mode<synchronous>, transform_indices = @transform_3, window_bounds = array<i64: 128, 128>}, {pipeline_mode = #tpu.pipeline_mode<synchronous>, transform_indices = @transform_4, window_bounds = array<i64: 1, 128>}, {pipeline_mode = #tpu.pipeline_mode<synchronous>, transform_indices = @transform_5, window_bounds = array<i64: 128, 128>}, {pipeline_mode = #tpu.pipeline_mode<synchronous>, transform_indices = @transform_6, window_bounds = array<i64: 1, 128>}, {pipeline_mode = #tpu.pipeline_mode<synchronous>, transform_indices = @transform_7, window_bounds = array<i64: 128, 8>}, {pipeline_mode = #tpu.pipeline_mode<synchronous>, transform_indices = @transform_8, window_bounds = array<i64: 1, 8>}, {transform_indices = @transform_9, window_bounds = array<i64: 8, 8>}]} {
    %c0 = arith.constant 0 : index
    %c0_0 = arith.constant 0 : index
    %0 = vector.load %arg1[%c0, %c0_0] : memref<8x4xf32, #tpu.memory_space<vmem>>, vector<8x4xf32>
    %c0_1 = arith.constant 0 : index
    %c0_2 = arith.constant 0 : index
    %1 = vector.load %arg2[%c0_1, %c0_2] : memref<4x128xf32, #tpu.memory_space<vmem>>, vector<4x128xf32>
    %2 = vector.extract_strided_slice %0 {offsets = [0, 0], sizes = [8, 1], strides = [1, 1]} : vector<8x4xf32> to vector<8x1xf32>
    %3 = vector.extract_strided_slice %1 {offsets = [0, 0], sizes = [1, 128], strides = [1, 1]} : vector<4x128xf32> to vector<1x128xf32>
    %4 = vector.broadcast %2 : vector<8x1xf32> to vector<8x128xf32>
    %5 = vector.broadcast %3 : vector<1x128xf32> to vector<8x128xf32>
    %6 = arith.mulf %4, %5 : vector<8x128xf32>
    %c0_3 = arith.constant 0 : index
    %c0_4 = arith.constant 0 : index
    %7 = vector.load %arg3[%c0_3, %c0_4] : memref<1x128xf32, #tpu.memory_space<vmem>>, vector<1x128xf32>
    %8 = vector.broadcast %7 : vector<1x128xf32> to vector<8x128xf32>
    %9 = arith.addf %6, %8 : vector<8x128xf32>
    %10 = vector.extract_strided_slice %0 {offsets = [0, 1], sizes = [8, 1], strides = [1, 1]} : vector<8x4xf32> to vector<8x1xf32>
    %11 = vector.extract_strided_slice %1 {offsets = [1, 0], sizes = [1, 128], strides = [1, 1]} : vector<4x128xf32> to vector<1x128xf32>
    %12 = vector.broadcast %10 : vector<8x1xf32> to vector<8x128xf32>
    %13 = vector.broadcast %11 : vector<1x128xf32> to vector<8x128xf32>
    %14 = arith.mulf %12, %13 : vector<8x128xf32>
    %15 = arith.addf %9, %14 : vector<8x128xf32>
    %16 = vector.extract_strided_slice %0 {offsets = [0, 2], sizes = [8, 1], strides = [1, 1]} : vector<8x4xf32> to vector<8x1xf32>
    %17 = vector.extract_strided_slice %1 {offsets = [2, 0], sizes = [1, 128], strides = [1, 1]} : vector<4x128xf32> to vector<1x128xf32>
    %18 = vector.broadcast %16 : vector<8x1xf32> to vector<8x128xf32>
    %19 = vector.broadcast %17 : vector<1x128xf32> to vector<8x128xf32>
    %20 = arith.mulf %18, %19 : vector<8x128xf32>
    %21 = arith.addf %15, %20 : vector<8x128xf32>
    %22 = vector.extract_strided_slice %0 {offsets = [0, 3], sizes = [8, 1], strides = [1, 1]} : vector<8x4xf32> to vector<8x1xf32>
    %23 = vector.extract_strided_slice %1 {offsets = [3, 0], sizes = [1, 128], strides = [1, 1]} : vector<4x128xf32> to vector<1x128xf32>
    %24 = vector.broadcast %22 : vector<8x1xf32> to vector<8x128xf32>
    %25 = vector.broadcast %23 : vector<1x128xf32> to vector<8x128xf32>
    %26 = arith.mulf %24, %25 : vector<8x128xf32>
    %27 = arith.addf %21, %26 : vector<8x128xf32>
    %cst = arith.constant 0.000000e+00 : f32
    %28 = vector.broadcast %cst : f32 to vector<8x128xf32>
    %29 = arith.maximumf %27, %28 : vector<8x128xf32>
    %30 = arith.truncf %29 : vector<8x128xf32> to vector<8x128xbf16>
    %c0_5 = arith.constant 0 : index
    %c0_6 = arith.constant 0 : index
    %31 = vector.load %arg4[%c0_5, %c0_6] : memref<128x128xbf16, #tpu.memory_space<vmem>>, vector<128x128xbf16>
    %cst_7 = arith.constant dense<0.000000e+00> : vector<8x128xf32>
    %32 = tpu.matmul %30, %31, %cst_7 {dimension_numbers = #tpu.dot_dimension_numbers<[1], [0], [0], [1], [0, 0, 1, 1], [], []>} : vector<8x128xbf16>, vector<128x128xbf16>, vector<8x128xf32> -> vector<8x128xf32>
    %c0_8 = arith.constant 0 : index
    %c0_9 = arith.constant 0 : index
    %33 = vector.load %arg5[%c0_8, %c0_9] : memref<1x128xf32, #tpu.memory_space<vmem>>, vector<1x128xf32>
    %34 = vector.broadcast %33 : vector<1x128xf32> to vector<8x128xf32>
    %35 = arith.addf %32, %34 : vector<8x128xf32>
    %cst_10 = arith.constant 0.000000e+00 : f32
    %36 = vector.broadcast %cst_10 : f32 to vector<8x128xf32>
    %37 = arith.maximumf %35, %36 : vector<8x128xf32>
    %38 = arith.truncf %37 : vector<8x128xf32> to vector<8x128xbf16>
    %c0_11 = arith.constant 0 : index
    %c0_12 = arith.constant 0 : index
    %39 = vector.load %arg6[%c0_11, %c0_12] : memref<128x128xbf16, #tpu.memory_space<vmem>>, vector<128x128xbf16>
    %cst_13 = arith.constant dense<0.000000e+00> : vector<8x128xf32>
    %40 = tpu.matmul %38, %39, %cst_13 {dimension_numbers = #tpu.dot_dimension_numbers<[1], [0], [0], [1], [0, 0, 1, 1], [], []>} : vector<8x128xbf16>, vector<128x128xbf16>, vector<8x128xf32> -> vector<8x128xf32>
    %c0_14 = arith.constant 0 : index
    %c0_15 = arith.constant 0 : index
    %41 = vector.load %arg7[%c0_14, %c0_15] : memref<1x128xf32, #tpu.memory_space<vmem>>, vector<1x128xf32>
    %42 = vector.broadcast %41 : vector<1x128xf32> to vector<8x128xf32>
    %43 = arith.addf %40, %42 : vector<8x128xf32>
    %cst_16 = arith.constant 0.000000e+00 : f32
    %44 = vector.broadcast %cst_16 : f32 to vector<8x128xf32>
    %45 = arith.maximumf %43, %44 : vector<8x128xf32>
    %46 = arith.truncf %45 : vector<8x128xf32> to vector<8x128xbf16>
    %c0_17 = arith.constant 0 : index
    %c0_18 = arith.constant 0 : index
    %47 = vector.load %arg8[%c0_17, %c0_18] : memref<128x8xbf16, #tpu.memory_space<vmem>>, vector<128x8xbf16>
    %cst_19 = arith.constant dense<0.000000e+00> : vector<8x8xf32>
    %48 = tpu.matmul %46, %47, %cst_19 {dimension_numbers = #tpu.dot_dimension_numbers<[1], [0], [0], [1], [0, 0, 1, 1], [], []>} : vector<8x128xbf16>, vector<128x8xbf16>, vector<8x8xf32> -> vector<8x8xf32>
    %c0_20 = arith.constant 0 : index
    %c0_21 = arith.constant 0 : index
    %49 = vector.load %arg9[%c0_20, %c0_21] : memref<1x8xf32, #tpu.memory_space<vmem>>, vector<1x8xf32>
    %50 = vector.broadcast %49 : vector<1x8xf32> to vector<8x8xf32>
    %51 = arith.addf %48, %50 : vector<8x8xf32>
    %52 = tpu.iota {dimensions = array<i32: 1>} : vector<8x8xi32>
    %c6_i32 = arith.constant 6 : i32
    %53 = vector.broadcast %c6_i32 : i32 to vector<8x8xi32>
    %54 = arith.cmpi slt, %52, %53 : vector<8x8xi32>
    %cst_22 = arith.constant 0xFF800000 : f32
    %55 = vector.broadcast %cst_22 : f32 to vector<8x8xf32>
    %56 = arith.select %54, %51, %55 : vector<8x8xi1>, vector<8x8xf32>
    %cst_23 = arith.constant dense<0xFF800000> : vector<8xf32>
    %57 = vector.multi_reduction <maximumf>, %56, %cst_23 [1] : vector<8x8xf32> to vector<8xf32>
    %58 = vector.shape_cast %57 : vector<8xf32> to vector<8x1xf32>
    %59 = vector.broadcast %58 : vector<8x1xf32> to vector<8x8xf32>
    %60 = arith.subf %56, %59 : vector<8x8xf32>
    %61 = math.exp %60 : vector<8x8xf32>
    %cst_24 = arith.constant dense<0.000000e+00> : vector<8xf32>
    %62 = vector.multi_reduction <add>, %61, %cst_24 [1] : vector<8x8xf32> to vector<8xf32>
    %63 = vector.shape_cast %62 : vector<8xf32> to vector<8x1xf32>
    %64 = tpu.reciprocal %63 : vector<8x1xf32> -> vector<8x1xf32>
    %65 = vector.broadcast %64 : vector<8x1xf32> to vector<8x8xf32>
    %66 = arith.mulf %61, %65 : vector<8x8xf32>
    %67 = arith.select %54, %66, %51 : vector<8x8xi1>, vector<8x8xf32>
    %c0_25 = arith.constant 0 : index
    %c0_26 = arith.constant 0 : index
    %68 = vector.load %arg10[%c0_25, %c0_26] : memref<8x8xf32, #tpu.memory_space<vmem>>, vector<8x8xf32>
    tpu.vector_store %arg10[%c0_25, %c0_26], %67 {strides = array<i32>} : memref<8x8xf32, #tpu.memory_space<vmem>>, vector<8x8xf32>,
    return
  }
  func.func @transform_0(%arg0: i32) -> (i32, i32) {
    %c0_i32 = arith.constant 0 : i32
    %c0_i32_0 = arith.constant 0 : i32
    return %arg0, %c0_i32 : i32, i32
  }
  func.func @transform_1(%arg0: i32) -> (i32, i32) {
    %c0_i32 = arith.constant 0 : i32
    %c0_i32_0 = arith.constant 0 : i32
    %c0_i32_1 = arith.constant 0 : i32
    return %c0_i32, %c0_i32_0 : i32, i32
  }
  func.func @transform_2(%arg0: i32) -> (i32, i32) {
    %c0_i32 = arith.constant 0 : i32
    %c0_i32_0 = arith.constant 0 : i32
    %c0_i32_1 = arith.constant 0 : i32
    return %c0_i32, %c0_i32_0 : i32, i32
  }
  func.func @transform_3(%arg0: i32) -> (i32, i32) {
    %c0_i32 = arith.constant 0 : i32
    %c0_i32_0 = arith.constant 0 : i32
    %c0_i32_1 = arith.constant 0 : i32
    return %c0_i32, %c0_i32_0 : i32, i32
  }
  func.func @transform_4(%arg0: i32) -> (i32, i32) {
    %c0_i32 = arith.constant 0 : i32
    %c0_i32_0 = arith.constant 0 : i32
    %c0_i32_1 = arith.constant 0 : i32
    return %c0_i32, %c0_i32_0 : i32, i32
  }
  func.func @transform_5(%arg0: i32) -> (i32, i32) {
    %c0_i32 = arith.constant 0 : i32
    %c0_i32_0 = arith.constant 0 : i32
    %c0_i32_1 = arith.constant 0 : i32
    return %c0_i32, %c0_i32_0 : i32, i32
  }
  func.func @transform_6(%arg0: i32) -> (i32, i32) {
    %c0_i32 = arith.constant 0 : i32
    %c0_i32_0 = arith.constant 0 : i32
    %c0_i32_1 = arith.constant 0 : i32
    return %c0_i32, %c0_i32_0 : i32, i32
  }
  func.func @transform_7(%arg0: i32) -> (i32, i32) {
    %c0_i32 = arith.constant 0 : i32
    %c0_i32_0 = arith.constant 0 : i32
    %c0_i32_1 = arith.constant 0 : i32
    return %c0_i32, %c0_i32_0 : i32, i32
  }
  func.func @transform_8(%arg0: i32) -> (i32, i32) {
    %c0_i32 = arith.constant 0 : i32
    %c0_i32_0 = arith.constant 0 : i32
    %c0_i32_1 = arith.constant 0 : i32
    return %c0_i32, %c0_i32_0 : i32, i32
  }
  func.func @transform_9(%arg0: i32) -> (i32, i32) {
    %c0_i32 = arith.constant 0 : i32
    %c0_i32_0 = arith.constant 0 : i32
    return %arg0, %c0_i32 : i32, i32
  }
}

</mosaic_0001>

<llo_original>
// kernel: tpu_custom_call.1
$region0: #{tpu_custom_call.1}
  #allocation0 [shape = 'u32[]', space=smem, size = 0x4, offset = 0x4, fixed_abs, tag = 'smem constant byte address 0x4 - core index']
  #allocation1 [shape = 'u32[144,128]{1,0:T(1,128)}', space=vmem, size = 0x12000, scoped, tag = 'internal scratch']
  %s0 = inlined_call_operand.vmem [shape: f32[8,4], index: 0, kind: input, shape index: {}]
  %s1 = inlined_call_operand.vmem [shape: f32[4,128], index: 1, kind: input, shape index: {}]
  %s2 = inlined_call_operand.vmem [shape: f32[1,128], index: 2, kind: input, shape index: {}]
  %s3 = inlined_call_operand.vmem [shape: bf16[128,128], index: 3, kind: input, shape index: {}]
  %s4 = inlined_call_operand.vmem [shape: f32[1,128], index: 4, kind: input, shape index: {}]
  %s5 = inlined_call_operand.hbm [shape: bf16[128,128], index: 5, kind: input, shape index: {}]
  %s6 = inlined_call_operand.vmem [shape: f32[1,128], index: 6, kind: input, shape index: {}]
  %s7 = inlined_call_operand.vmem [shape: bf16[128,8], index: 7, kind: input, shape index: {}]
  %s8 = inlined_call_operand.vmem [shape: f32[1,8], index: 8, kind: input, shape index: {}]
  %s9 = inlined_call_operand.hbm [shape: f32[8,8], index: 9, kind: output, shape index: {}]
  %s10 = sld [smem:[#allocation0]]
  $region50: #{tpu_custom_call.1} parent=0
    _
  %s12 = ssub.s32 1, %s10
  %s13 = scalar_select 0, %s12, %s10
  $region1: #{tpu_custom_call.1} parent=0
    #allocation2 [shape = 'u8[32768]{0}', space=vmem, size = 0x8000, scoped, tag = 'input window, operand 5, single buffered']
    #allocation3 [shape = 's32[1]{0}', space=sflag, size = 0x4, scoped, tag = 'scoped memory for tpu_custom_call.1']
    #allocation4 [shape = 's32[1]{0}', space=sflag, size = 0x4, scoped, tag = 'scoped memory for tpu_custom_call.1']
    #allocation5 [shape = 'u8[4096]{0}', space=vmem, size = 0x1000, scoped, tag = 'output window, operand 0, single buffered']
    %14 = vsyncpa [#allocation3], 0
    %15 = vsyncpa [#allocation4], 0
    // Predicated region
    $region2: #{tpu_custom_call.1} parent=1 // pred_check
      _
    $region3: #{tpu_custom_call.1} parent=1 // pred_check_branch
      %17 = sbr.rel (0) target = $region5
    $region4: #{tpu_custom_call.1} parent=1 // pred_region
      _
    $region5: #{tpu_custom_call.1} parent=1 // pred_fallthru
      _
    // Predicated region
    $region6: #{tpu_custom_call.1} parent=1 // pred_check
      _
    $region7: #{tpu_custom_call.1} parent=1 // pred_check_branch
      %19 = sbr.rel (0) target = $region9
    $region8: #{tpu_custom_call.1} parent=1 // pred_region
      _
    $region9: #{tpu_custom_call.1} parent=1 // pred_fallthru
      _
    // Predicated region
    $region10: #{tpu_custom_call.1} parent=1 // pred_check
      _
    $region11: #{tpu_custom_call.1} parent=1 // pred_check_branch
      %21 = sbr.rel (0) target = $region13
    $region12: #{tpu_custom_call.1} parent=1 // pred_region
      _
    $region13: #{tpu_custom_call.1} parent=1 // pred_fallthru
      _
    // Predicated region
    $region14: #{tpu_custom_call.1} parent=1 // pred_check
      _
    $region15: #{tpu_custom_call.1} parent=1 // pred_check_branch
      %23 = sbr.rel (0) target = $region17
    $region16: #{tpu_custom_call.1} parent=1 // pred_region
      _
    $region17: #{tpu_custom_call.1} parent=1 // pred_fallthru
      _
    // Predicated region
    $region18: #{tpu_custom_call.1} parent=1 // pred_check
      _
    $region19: #{tpu_custom_call.1} parent=1 // pred_check_branch
      %25 = sbr.rel (0) target = $region21
    $region20: #{tpu_custom_call.1} parent=1 // pred_region
      _
    $region21: #{tpu_custom_call.1} parent=1 // pred_fallthru
      _
    // Predicated region
    $region22: #{tpu_custom_call.1} parent=1 // pred_check
      _
    $region23: #{tpu_custom_call.1} parent=1 // pred_check_branch
      %27 = sbr.rel (0) target = $region25
    $region24: #{tpu_custom_call.1} parent=1 // pred_region
      %s29 = ssub.s32 1024, 1024
      %30 = vsyncadd [#allocation3], %s29
      %s31 = sshll.u32 [#allocation2], 4
      %s32 = int_to_ptr.vmem [resolvable:$true] %s31
      %37 = dma.hbm_to_vmem [thread:$0]  %s5, 1024, %s32, [#allocation3], 64, 64, 4
    $region25: #{tpu_custom_call.1} parent=1 // pred_fallthru
      _
    // Predicated region
    $region26: #{tpu_custom_call.1} parent=1 // pred_check
      _
    $region27: #{tpu_custom_call.1} parent=1 // pred_check_branch
      %39 = sbr.rel (0) target = $region29
    $region28: #{tpu_custom_call.1} parent=1 // pred_region
      _
    $region29: #{tpu_custom_call.1} parent=1 // pred_fallthru
      _
    // Predicated region
    $region30: #{tpu_custom_call.1} parent=1 // pred_check
      _
    $region31: #{tpu_custom_call.1} parent=1 // pred_check_branch
      %41 = sbr.rel (0) target = $region33
    $region32: #{tpu_custom_call.1} parent=1 // pred_region
      _
    $region33: #{tpu_custom_call.1} parent=1 // pred_fallthru
      _
    // Predicated region
    $region34: #{tpu_custom_call.1} parent=1 // pred_check
      _
    $region35: #{tpu_custom_call.1} parent=1 // pred_check_branch
      %43 = sbr.rel (0) target = $region37
    $region36: #{tpu_custom_call.1} parent=1 // pred_region
      _
    $region37: #{tpu_custom_call.1} parent=1 // pred_fallthru
      _
    // Predicated region
    $region38: #{tpu_custom_call.1} parent=1 // pred_check
      _
    $region39: #{tpu_custom_call.1} parent=1 // pred_check_branch
      %45 = sbr.rel (0) target = $region41
    $region40: #{tpu_custom_call.1} parent=1 // pred_region
      %46 = dma.done [#allocation3], 1024
    $region41: #{tpu_custom_call.1} parent=1 // pred_fallthru
      _
    %v48 = vld [vmem:[%s0] sm:$0xff]
    %v49 = vld [vmem:[%s1] sm:$0xf]
    %51 = vset.pattern.permute.xlu0 0
    %52 = vperm.xlu0 %51, %v48
    %v53 = vpop.permute.xlu0 %52
    %v55 = vlaneseq
    %v56 = vshrl.u32 %v55, 7
    %v57 = vsub.s32 0, %v56
    %v58 = vrot.slane %v49, %v57
    %v59 = vmul.f32 %v53, %v58
    %v60 = vld [vmem:[%s2] sm:$0x1]
    %v62 = vlaneseq
    %v63 = vshrl.u32 %v62, 7
    %v64 = vsub.s32 0, %v63
    %v65 = vrot.slane %v60, %v64
    %v67 = vadd.f32 %v59, %v65
    %68 = vset.pattern.permute.xlu0 1
    %69 = vperm.xlu0 %68, %v48
    %v70 = vpop.permute.xlu0 %69
    %v72 = vlaneseq
    %v73 = vshrl.u32 %v72, 7
    %v74 = vsub.s32 1, %v73
    %v75 = vrot.slane %v49, %v74
    %v76 = vmul.f32 %v70, %v75
    %v77 = vadd.f32 %v67, %v76
    %78 = vset.pattern.permute.xlu0 2
    %79 = vperm.xlu0 %78, %v48
    %v80 = vpop.permute.xlu0 %79
    %v82 = vlaneseq
    %v83 = vshrl.u32 %v82, 7
    %v84 = vsub.s32 2, %v83
    %v85 = vrot.slane %v49, %v84
    %v86 = vmul.f32 %v80, %v85
    %v87 = vadd.f32 %v77, %v86
    %88 = vset.pattern.permute.xlu0 3
    %89 = vperm.xlu0 %88, %v48
    %v90 = vpop.permute.xlu0 %89
    %v92 = vlaneseq
    %v93 = vshrl.u32 %v92, 7
    %v94 = vsub.s32 3, %v93
    %v95 = vrot.slane %v49, %v94
    %v96 = vmul.f32 %v90, %v95
    %v97 = vadd.f32 %v87, %v96
    %v98 = vmax.f32 %v97, 0.0
    %v99 = vpack.c.bf16 %v98, %v98
    %v100 = vld [vmem:[%s3] sm:$0xf]
    %v101 = vld [vmem:[%s3 + $0x4] sm:$0xf]
    %v102 = vld [vmem:[%s3 + $0x8] sm:$0xf]
    %v103 = vld [vmem:[%s3 + $0xc] sm:$0xf]
    %v104 = vld [vmem:[%s3 + $0x10] sm:$0xf]
    %v105 = vld [vmem:[%s3 + $0x14] sm:$0xf]
    %v106 = vld [vmem:[%s3 + $0x18] sm:$0xf]
    %v107 = vld [vmem:[%s3 + $0x1c] sm:$0xf]
    %v108 = vld [vmem:[%s3 + $0x20] sm:$0xf]
    %v109 = vld [vmem:[%s3 + $0x24] sm:$0xf]
    %v110 = vld [vmem:[%s3 + $0x28] sm:$0xf]
    %v111 = vld [vmem:[%s3 + $0x2c] sm:$0xf]
    %v112 = vld [vmem:[%s3 + $0x30] sm:$0xf]
    %v113 = vld [vmem:[%s3 + $0x34] sm:$0xf]
    %v114 = vld [vmem:[%s3 + $0x38] sm:$0xf]
    %v115 = vld [vmem:[%s3 + $0x3c] sm:$0xf]
    %v116 = vld [vmem:[%s4] sm:$0x1]
    %v118 = vlaneseq
    %v119 = vshrl.u32 %v118, 7
    %v120 = vsub.s32 0, %v119
    %v121 = vrot.slane %v116, %v120
    %v139 = vunpack.c.l.b16 %v100
    %v140 = vunpack.c.l.b16 %v101
    %v141 = vunpack.c.l.b16 %v102
    %v142 = vunpack.c.l.b16 %v103
    %v143 = vunpack.c.l.b16 %v104
    %v144 = vunpack.c.l.b16 %v105
    %v145 = vunpack.c.l.b16 %v106
    %v146 = vunpack.c.l.b16 %v107
    %v147 = vunpack.c.l.b16 %v108
    %v148 = vunpack.c.l.b16 %v109
    %v149 = vunpack.c.l.b16 %v110
    %v150 = vunpack.c.l.b16 %v111
    %v151 = vunpack.c.l.b16 %v112
    %v152 = vunpack.c.l.b16 %v113
    %v153 = vunpack.c.l.b16 %v114
    %v154 = vunpack.c.l.b16 %v115
    %v155 = vpack.c.b16 %v140, %v139
    %v156 = vpack.c.b16 %v142, %v141
    %v157 = vpack.c.b16 %v144, %v143
    %v158 = vpack.c.b16 %v146, %v145
    %v159 = vpack.c.b16 %v148, %v147
    %v160 = vpack.c.b16 %v150, %v149
    %v161 = vpack.c.b16 %v152, %v151
    %v162 = vpack.c.b16 %v154, %v153
    %171 = vmatprep.subr.bf16.mxu0 0
    %172 = vmatpush1.bf16.msra.mxu0 %v162
    %173 = vmatprep.subr.bf16.mxu0 0
    %174 = vmatpush1.bf16.msra.mxu0 %v161
    %175 = vmatprep.subr.bf16.mxu0 0
    %176 = vmatpush1.bf16.msra.mxu0 %v160
    %177 = vmatprep.subr.bf16.mxu0 0
    %178 = vmatpush1.bf16.msra.mxu0 %v159
    %179 = vmatprep.subr.bf16.mxu0 0
    %180 = vmatpush1.bf16.msra.mxu0 %v158
    %181 = vmatprep.subr.bf16.mxu0 0
    %182 = vmatpush1.bf16.msra.mxu0 %v157
    %183 = vmatprep.subr.bf16.mxu0 0
    %184 = vmatpush1.bf16.msra.mxu0 %v156
    %185 = vmatprep.subr.bf16.mxu0 0
    %186 = vmatpush1.bf16.msra.mxu0 %v155
    %187 = vmatprep.subr.bf16.mxu0 0
    %188 = vmatpush2.bf16.msra.mxu0 0
    %189 = vmatprep.subr.bf16.mxu0 0
    %190 = vmatpush2.bf16.msra.mxu0 0
    %191 = vmatprep.subr.bf16.mxu0 0
    %192 = vmatpush2.bf16.msra.mxu0 0
    %193 = vmatprep.subr.bf16.mxu0 0
    %194 = vmatpush2.bf16.msra.mxu0 0
    %195 = vmatprep.subr.bf16.mxu0 0
    %196 = vmatpush2.bf16.msra.mxu0 0
    %197 = vmatprep.subr.bf16.mxu0 0
    %198 = vmatpush2.bf16.msra.mxu0 0
    %199 = vmatprep.subr.bf16.mxu0 0
    %200 = vmatpush2.bf16.msra.mxu0 0
    %201 = vmatprep.subr.bf16.mxu0 0
    %202 = vmatpush2.bf16.msra.mxu0 0
    %203 = vmatprep.mubr.bf16.mxu0 0
    %204 = vmatmul.mubr.bf16.gmra.mxu0 %v99
    %v205 = vpop.f32.mrf.mxu0
    %v206 = vadd.f32 %v121, %v205
    %v207 = vpop.f32.mrf.mxu0
    %v208 = vpop.f32.mrf.mxu0
    %v209 = vpop.f32.mrf.mxu0
    %210 = vdwg.mxu0
    %v211 = vmax.f32 %v206, 0.0
    %v212 = vpack.c.bf16 %v211, %v211
    %v213 = vld [vmem:[#allocation2] sm:$0xf]
    %v214 = vld [vmem:[#allocation2 + $0x4] sm:$0xf]
    %v215 = vld [vmem:[#allocation2 + $0x8] sm:$0xf]
    %v216 = vld [vmem:[#allocation2 + $0xc] sm:$0xf]
    %v217 = vld [vmem:[#allocation2 + $0x10] sm:$0xf]
    %v218 = vld [vmem:[#allocation2 + $0x14] sm:$0xf]
    %v219 = vld [vmem:[#allocation2 + $0x18] sm:$0xf]
    %v220 = vld [vmem:[#allocation2 + $0x1c] sm:$0xf]
    %v221 = vld [vmem:[#allocation2 + $0x20] sm:$0xf]
    %v222 = vld [vmem:[#allocation2 + $0x24] sm:$0xf]
    %v223 = vld [vmem:[#allocation2 + $0x28] sm:$0xf]
    %v224 = vld [vmem:[#allocation2 + $0x2c] sm:$0xf]
    %v225 = vld [vmem:[#allocation2 + $0x30] sm:$0xf]
    %v226 = vld [vmem:[#allocation2 + $0x34] sm:$0xf]
    %v227 = vld [vmem:[#allocation2 + $0x38] sm:$0xf]
    %v228 = vld [vmem:[#allocation2 + $0x3c] sm:$0xf]
    %v229 = vld [vmem:[%s6] sm:$0x1]
    %v231 = vlaneseq
    %v232 = vshrl.u32 %v231, 7
    %v233 = vsub.s32 0, %v232
    %v234 = vrot.slane %v229, %v233
    %v252 = vunpack.c.l.b16 %v213
    %v253 = vunpack.c.l.b16 %v214
    %v254 = vunpack.c.l.b16 %v215
    %v255 = vunpack.c.l.b16 %v216
    %v256 = vunpack.c.l.b16 %v217
    %v257 = vunpack.c.l.b16 %v218
    %v258 = vunpack.c.l.b16 %v219
    %v259 = vunpack.c.l.b16 %v220
    %v260 = vunpack.c.l.b16 %v221
    %v261 = vunpack.c.l.b16 %v222
    %v262 = vunpack.c.l.b16 %v223
    %v263 = vunpack.c.l.b16 %v224
    %v264 = vunpack.c.l.b16 %v225
    %v265 = vunpack.c.l.b16 %v226
    %v266 = vunpack.c.l.b16 %v227
    %v267 = vunpack.c.l.b16 %v228
    %v268 = vpack.c.b16 %v253, %v252
    %v269 = vpack.c.b16 %v255, %v254
    %v270 = vpack.c.b16 %v257, %v256
    %v271 = vpack.c.b16 %v259, %v258
    %v272 = vpack.c.b16 %v261, %v260
    %v273 = vpack.c.b16 %v263, %v262
    %v274 = vpack.c.b16 %v265, %v264
    %v275 = vpack.c.b16 %v267, %v266
    %284 = vmatprep.subr.bf16.mxu0 0
    %285 = vmatpush1.bf16.msra.mxu0 %v275
    %286 = vmatprep.subr.bf16.mxu0 0
    %287 = vmatpush1.bf16.msra.mxu0 %v274
    %288 = vmatprep.subr.bf16.mxu0 0
    %289 = vmatpush1.bf16.msra.mxu0 %v273
    %290 = vmatprep.subr.bf16.mxu0 0
    %291 = vmatpush1.bf16.msra.mxu0 %v272
    %292 = vmatprep.subr.bf16.mxu0 0
    %293 = vmatpush1.bf16.msra.mxu0 %v271
    %294 = vmatprep.subr.bf16.mxu0 0
    %295 = vmatpush1.bf16.msra.mxu0 %v270
    %296 = vmatprep.subr.bf16.mxu0 0
    %297 = vmatpush1.bf16.msra.mxu0 %v269
    %298 = vmatprep.subr.bf16.mxu0 0
    %299 = vmatpush1.bf16.msra.mxu0 %v268
    %300 = vmatprep.subr.bf16.mxu0 0
    %301 = vmatpush2.bf16.msra.mxu0 0
    %302 = vmatprep.subr.bf16.mxu0 0
    %303 = vmatpush2.bf16.msra.mxu0 0
    %304 = vmatprep.subr.bf16.mxu0 0
    %305 = vmatpush2.bf16.msra.mxu0 0
    %306 = vmatprep.subr.bf16.mxu0 0
    %307 = vmatpush2.bf16.msra.mxu0 0
    %308 = vmatprep.subr.bf16.mxu0 0
    %309 = vmatpush2.bf16.msra.mxu0 0
    %310 = vmatprep.subr.bf16.mxu0 0
    %311 = vmatpush2.bf16.msra.mxu0 0
    %312 = vmatprep.subr.bf16.mxu0 0
    %313 = vmatpush2.bf16.msra.mxu0 0
    %314 = vmatprep.subr.bf16.mxu0 0
    %315 = vmatpush2.bf16.msra.mxu0 0
    %316 = vmatprep.mubr.bf16.mxu0 0
    %317 = vmatmul.mubr.bf16.gmra.mxu0 %v212
    %v318 = vpop.f32.mrf.mxu0
    %v319 = vadd.f32 %v234, %v318
    %v320 = vpop.f32.mrf.mxu0
    %v321 = vpop.f32.mrf.mxu0
    %v322 = vpop.f32.mrf.mxu0
    %323 = vdwg.mxu0
    %v324 = vmax.f32 %v319, 0.0
    %v325 = vpack.c.bf16 %v324, %v324
    %v326 = vld [vmem:[%s7] sm:$0xf]
    %v327 = vld [vmem:[%s7 + $0x4] sm:$0xf]
    %v328 = vld [vmem:[%s7 + $0x8] sm:$0xf]
    %v329 = vld [vmem:[%s7 + $0xc] sm:$0xf]
    %v330 = vld [vmem:[%s7 + $0x10] sm:$0xf]
    %v331 = vld [vmem:[%s7 + $0x14] sm:$0xf]
    %v332 = vld [vmem:[%s7 + $0x18] sm:$0xf]
    %v333 = vld [vmem:[%s7 + $0x1c] sm:$0xf]
    %v334 = vld [vmem:[%s7 + $0x20] sm:$0xf]
    %v335 = vld [vmem:[%s7 + $0x24] sm:$0xf]
    %v336 = vld [vmem:[%s7 + $0x28] sm:$0xf]
    %v337 = vld [vmem:[%s7 + $0x2c] sm:$0xf]
    %v338 = vld [vmem:[%s7 + $0x30] sm:$0xf]
    %v339 = vld [vmem:[%s7 + $0x34] sm:$0xf]
    %v340 = vld [vmem:[%s7 + $0x38] sm:$0xf]
    %v341 = vld [vmem:[%s7 + $0x3c] sm:$0xf]
    %v342 = vld [vmem:[%s8] sm:$0x1]
    %v344 = vlaneseq
    %v345 = vshrl.u32 %v344, 7
    %v346 = vsub.s32 0, %v345
    %v347 = vrot.slane %v342, %v346
    %v365 = vunpack.c.l.b16 %v326
    %v366 = vunpack.c.l.b16 %v327
    %v367 = vunpack.c.l.b16 %v328
    %v368 = vunpack.c.l.b16 %v329
    %v369 = vunpack.c.l.b16 %v330
    %v370 = vunpack.c.l.b16 %v331
    %v371 = vunpack.c.l.b16 %v332
    %v372 = vunpack.c.l.b16 %v333
    %v373 = vunpack.c.l.b16 %v334
    %v374 = vunpack.c.l.b16 %v335
    %v375 = vunpack.c.l.b16 %v336
    %v376 = vunpack.c.l.b16 %v337
    %v377 = vunpack.c.l.b16 %v338
    %v378 = vunpack.c.l.b16 %v339
    %v379 = vunpack.c.l.b16 %v340
    %v380 = vunpack.c.l.b16 %v341
    %v381 = vpack.c.b16 %v366, %v365
    %v382 = vpack.c.b16 %v368, %v367
    %v383 = vpack.c.b16 %v370, %v369
    %v384 = vpack.c.b16 %v372, %v371
    %v385 = vpack.c.b16 %v374, %v373
    %v386 = vpack.c.b16 %v376, %v375
    %v387 = vpack.c.b16 %v378, %v377
    %v388 = vpack.c.b16 %v380, %v379
    %397 = vmatprep.subr.bf16.mxu0 0
    %398 = vmatpush1.bf16.msra.mxu0 %v388
    %399 = vmatprep.subr.bf16.mxu0 0
    %400 = vmatpush1.bf16.msra.mxu0 %v387
    %401 = vmatprep.subr.bf16.mxu0 0
    %402 = vmatpush1.bf16.msra.mxu0 %v386
    %403 = vmatprep.subr.bf16.mxu0 0
    %404 = vmatpush1.bf16.msra.mxu0 %v385
    %405 = vmatprep.subr.bf16.mxu0 0
    %406 = vmatpush1.bf16.msra.mxu0 %v384
    %407 = vmatprep.subr.bf16.mxu0 0
    %408 = vmatpush1.bf16.msra.mxu0 %v383
    %409 = vmatprep.subr.bf16.mxu0 0
    %410 = vmatpush1.bf16.msra.mxu0 %v382
    %411 = vmatprep.subr.bf16.mxu0 0
    %412 = vmatpush1.bf16.msra.mxu0 %v381
    %413 = vmatprep.subr.bf16.mxu0 0
    %414 = vmatpush2.bf16.msra.mxu0 0
    %415 = vmatprep.subr.bf16.mxu0 0
    %416 = vmatpush2.bf16.msra.mxu0 0
    %417 = vmatprep.subr.bf16.mxu0 0
    %418 = vmatpush2.bf16.msra.mxu0 0
    %419 = vmatprep.subr.bf16.mxu0 0
    %420 = vmatpush2.bf16.msra.mxu0 0
    %421 = vmatprep.subr.bf16.mxu0 0
    %422 = vmatpush2.bf16.msra.mxu0 0
    %423 = vmatprep.subr.bf16.mxu0 0
    %424 = vmatpush2.bf16.msra.mxu0 0
    %425 = vmatprep.subr.bf16.mxu0 0
    %426 = vmatpush2.bf16.msra.mxu0 0
    %427 = vmatprep.subr.bf16.mxu0 0
    %428 = vmatpush2.bf16.msra.mxu0 0
    %429 = vmatprep.mubr.bf16.mxu0 0
    %430 = vmatmul.mubr.bf16.gmra.mxu0 %v325
    %v431 = vpop.f32.mrf.mxu0
    %v432 = vadd.f32 %v347, %v431
    %v433 = vpop.f32.mrf.mxu0
    %v434 = vpop.f32.mrf.mxu0
    %v435 = vpop.f32.mrf.mxu0
    %436 = vdwg.mxu0
    %v437 = vlaneseq
    %v438 = vand.u32 %v437, 127
    %vm439 = vcmp.lt.s32.totalorder %v438, 6
    %v440 = vsel %vm439, %v432, -inf
    %vm441 = vcmask 64512
    %v442 = vsel %vm441, %v440, -inf
    %443 = vmax.xlane.f32.xlu0 %v442
    %v444 = vpop.xlane.xlu0 %443
    %v445 = vsub.f32 %v440, %v444
    %v446 = vmul.f32 %v445, 1.442695
    %v447 = vpow.pop %v446
    %v448 = vsel %vm441, %v447, 0.0
    %449 = vadd.xlane.f32.xlu0 %v448
    %v450 = vpop.xlane.xlu0 %449
    %v451 = vrcp.pop %v450
    %v452 = vmul.f32 %v447, %v451
    %v453 = vsel %vm439, %v452, %v432
    %454 = vst.msk [vmem:[#allocation5] sm:$0xff] %vm441, %v453
    // Predicated region
    $region42: #{tpu_custom_call.1} parent=1 // pred_check
      _
    $region43: #{tpu_custom_call.1} parent=1 // pred_check_branch
      %456 = sbr.rel (0) target = $region45
    $region44: #{tpu_custom_call.1} parent=1 // pred_region
      %s458 = ssub.s32 128, 128
      %459 = vsyncadd [#allocation4], %s458
      %s461 = sshll.u32 [#allocation5], 4
      %s462 = int_to_ptr.vmem [resolvable:$true] %s461
      %464 = dma.vmem_to_hbm [thread:$0]  %s462, 128, %s9, [#allocation4]
    $region45: #{tpu_custom_call.1} parent=1 // pred_fallthru
      _
    // Predicated region
    $region46: #{tpu_custom_call.1} parent=1 // pred_check
      _
    $region47: #{tpu_custom_call.1} parent=1 // pred_check_branch
      %466 = sbr.rel (0) target = $region49
    $region48: #{tpu_custom_call.1} parent=1 // pred_region
      %467 = dma.done [#allocation4], 128
    $region49: #{tpu_custom_call.1} parent=1 // pred_fallthru
      _
    %468 = vsyncpa [#allocation3], 1
    %469 = vsyncpa [#allocation4], 1

</llo_original>
